<compile_context>
chip_gen: v5e
topology: v5e:2x2
jax: 0.10.0
libtpu: 0.0.40
codegen_flags: <defaults>
</compile_context>

<pallas_src>
import jax
import jax.numpy as jnp
from jax.experimental import pallas as pl
from jax.experimental.pallas import tpu as pltpu

BN_EPS = 1e-5
SOFTPLUS_THRESHOLD = 20.0  # torch.nn.functional.softplus default (beta=1, threshold=20)
_LANE = 128
_SUBLANE = 8


def _softplus(x):
    # torch softplus: beta=1, threshold=20
    return jnp.where(x > SOFTPLUS_THRESHOLD, x,
                     jnp.log1p(jnp.exp(jnp.minimum(x, SOFTPLUS_THRESHOLD))))


def _align(n, m):
    return ((n + m - 1) // m) * m


def _apply_activation(h, act):
    if act == "ReLU":
        return jnp.maximum(h, 0.0)
    if act == "Tanh":
        return jnp.tanh(h)
    if act == "Sigmoid":
        return jax.nn.sigmoid(h)
    if act == "Linear":
        return h
    # TODO(synk): map additional torch.nn activations if the config uses them.
    return h


def _make_encoder_kernel(layout, activations, matmul_dtype):
    """Fused: [Linear(no bias) -> BN(train) -> act]*L -> merged mean/var head."""
    hidden_layout = layout["hidden"]                # list of (fan_in, fan_out, col_off)
    head_fan_in, head_out, head_off = layout["head"]

    def kernel(x_ref, w_ref, gb_ref, out_ref):
        # w_ref : (max_in, total_cols) matmul_dtype, every matrix lane-aligned
        # gb_ref: (3, total_cols) f32 ; row0=gamma (or head bias), row1=beta,
        #         row2=softplus lane mask (1.0 on the var half of the head slot)
        x = x_ref[...].astype(jnp.float32)

        for li, (fan_in, fan_out, off) in enumerate(hidden_layout):
            w = w_ref[0:fan_in, off:off + fan_out]
            # Linear without bias (bias absorbed by BN's mean subtraction).
            h = jnp.dot(x.astype(matmul_dtype), w,
                        preferred_element_type=jnp.float32)
            # BatchNorm1d, training mode: biased batch variance, eps in rsqrt.
            mean = jnp.mean(h, axis=0, keepdims=True)
            hc = h - mean
            var = jnp.mean(hc * hc, axis=0, keepdims=True)
            gamma = gb_ref[0:1, off:off + fan_out]
            beta = gb_ref[1:2, off:off + fan_out]
            scale = jax.lax.rsqrt(var + BN_EPS) * gamma      # fused (1,D) scale
            x = _apply_activation(hc * scale + beta, activations[li])

        # Merged mean/var head: one matmul, softplus on the var half via mask.
        w_h = w_ref[0:head_fan_in, head_off:head_off + head_out]
        b_h = gb_ref[0:1, head_off:head_off + head_out]
        sp_mask = gb_ref[2:3, head_off:head_off + head_out] > 0.5
        head = jnp.dot(x.astype(matmul_dtype), w_h,
                       preferred_element_type=jnp.float32) + b_h
        out_ref[...] = jnp.where(sp_mask, _softplus(head), head)

    return kernel


def init_encoder_params(key, encoder_neurons, latent_dim):
    """Raw parameters with shapes matching the torch module."""
    params = {"hidden": []}
    k = key
    for i in range(len(encoder_neurons) - 1):
        fan_in, fan_out = encoder_neurons[i], encoder_neurons[i + 1]
        k, k1, k2 = jax.random.split(k, 3)
        bound = 1.0 / jnp.sqrt(fan_in)
        w = jax.random.uniform(k1, (fan_out, fan_in), jnp.float32, -bound, bound)
        b = jax.random.uniform(k2, (fan_out,), jnp.float32, -bound, bound)
        gamma = jnp.ones((fan_out,), jnp.float32)
        beta = jnp.zeros((fan_out,), jnp.float32)
        params["hidden"].append((w, b, gamma, beta))
    fan_in = encoder_neurons[-1]
    bound = 1.0 / jnp.sqrt(fan_in)
    k, k1, k2, k3, k4 = jax.random.split(k, 5)
    params["mean"] = (
        jax.random.uniform(k1, (latent_dim, fan_in), jnp.float32, -bound, bound),
        jax.random.uniform(k2, (latent_dim,), jnp.float32, -bound, bound),
    )
    params["var"] = (
        jax.random.uniform(k3, (latent_dim, fan_in), jnp.float32, -bound, bound),
        jax.random.uniform(k4, (latent_dim,), jnp.float32, -bound, bound),
    )
    return params


def prepare_encoder_params(params, latent_dim, matmul_dtype=jnp.float32):
    """One-time packing of ALL parameters into two buffers (outside hot path).

    Returns (w_all, gb_all, layout):
      w_all  : (max_in_pad, total_cols) matmul_dtype — each w.T placed at a
               128-lane-aligned column offset (head = hstack(wm.T, wv.T)).
      gb_all : (3, total_cols) f32 — row0: gamma per hidden layer / head bias,
               row1: beta, row2: softplus mask (1.0 on var half of head slot).
      layout : static per-layer (fan_in, fan_out, col_off) + head info.
    Hidden-layer biases are intentionally dropped (no-op before BN-train).
    """
    hidden = params["hidden"]
    dims = []
    for (w, _b, _g, _be) in hidden:
        fan_out, fan_in = w.shape
        dims.append((fan_in, fan_out))
    wm, bm = params["mean"]
    wv, bv = params["var"]
    head_fan_in = wm.shape[1]
    head_out = 2 * latent_dim

    # 128-lane-aligned column offsets: each matrix starts on a lane-tile
    # boundary so in-kernel static slices are clean vector loads.
    offsets, col = [], 0
    for (_fi, fo) in dims:
        offsets.append(col)
        col += _align(fo, _LANE)
    head_off = col
    col += _align(head_out, _LANE)
    total_cols = col
    max_in_pad = _align(max([fi for (fi, _) in dims] + [head_fan_in]), _SUBLANE)

    w_all = jnp.zeros((max_in_pad, total_cols), matmul_dtype)
    for (w, _b, _g, _be), (fi, fo), off in zip(hidden, dims, offsets):
        w_all = w_all.at[:fi, off:off + fo].set(jnp.asarray(w.T, matmul_dtype))
    w_head_t = jnp.concatenate([wm.T, wv.T], axis=1).astype(matmul_dtype)
    w_all = w_all.at[:head_fan_in, head_off:head_off + head_out].set(w_head_t)

    gb_all = jnp.zeros((3, total_cols), jnp.float32)
    for (_w, _b, g, be), (fi, fo), off in zip(hidden, dims, offsets):
        gb_all = gb_all.at[0, off:off + fo].set(g)
        gb_all = gb_all.at[1, off:off + fo].set(be)
    b_head = jnp.concatenate([bm, bv], axis=0)
    gb_all = gb_all.at[0, head_off:head_off + head_out].set(b_head)
    gb_all = gb_all.at[2, head_off + latent_dim:head_off + head_out].set(1.0)

    layout = {
        "hidden": [(fi, fo, off) for (fi, fo), off in zip(dims, offsets)],
        "head": (head_fan_in, head_out, head_off),
        "latent_dim": latent_dim,
    }
    return w_all, gb_all, layout


def encoder_forward_pallas(x, w_all, gb_all, layout, encoder_activation,
                           matmul_dtype=jnp.float32):
    B = x.shape[0]
    latent_dim = layout["latent_dim"]
    kernel = _make_encoder_kernel(layout, encoder_activation, matmul_dtype)

    vmem_spec = pl.BlockSpec(memory_space=pltpu.MemorySpace.VMEM)
    out = pl.pallas_call(
        kernel,
        out_shape=jax.ShapeDtypeStruct((B, 2 * latent_dim), jnp.float32),
        in_specs=[vmem_spec, vmem_spec, vmem_spec],
        out_specs=vmem_spec,
    )(x, w_all, gb_all)
    return {"z_mu": out[:, :latent_dim], "z_var": out[:, latent_dim:]}


def encoder_forward_ref(x, params, encoder_activation):
    """Pure-JAX reference for validation (keeps hidden biases; same math)."""
    h = x
    for (w, b, g, be), act in zip(params["hidden"], encoder_activation):
        h = h @ w.T + b
        mean = jnp.mean(h, axis=0, keepdims=True)
        var = jnp.mean((h - mean) ** 2, axis=0, keepdims=True)
        h = (h - mean) / jnp.sqrt(var + BN_EPS) * g + be
        h = _apply_activation(h, act)
    wm, bm = params["mean"]
    wv, bv = params["var"]
    mu = h @ wm.T + bm
    pre = h @ wv.T + bv
    return {"z_mu": mu, "z_var": _softplus(pre)}


if __name__ == "__main__":
    # Small config consistent with the dense VAE encoder.
    encoder_neurons = [16, 32, 32]          # input dim 16, two hidden layers of 32
    encoder_activation = ["ReLU", "ReLU"]   # one per hidden layer
    latent_dim = 8
    batch = 8

    key = jax.random.PRNGKey(0)
    kx, kp = jax.random.split(key)
    x = jax.random.normal(kx, (batch, encoder_neurons[0]), jnp.float32)
    params = init_encoder_params(kp, encoder_neurons, latent_dim)

    # One-time packing. f32 matmuls keep exact PyTorch semantics; at scale pass
    # matmul_dtype=jnp.bfloat16 on v6e/v7x (keep BN/activation math in f32,
    # especially on v5e which has no bf16 VPU/EUP path).
    w_all, gb_all, layout = prepare_encoder_params(
        params, latent_dim, matmul_dtype=jnp.float32)

    out = encoder_forward_pallas(x, w_all, gb_all, layout, encoder_activation)
    jax.block_until_ready(out)

    ref = encoder_forward_ref(x, params, encoder_activation)
    assert jnp.allclose(out["z_mu"], ref["z_mu"], atol=1e-4, rtol=1e-4)
    assert jnp.allclose(out["z_var"], ref["z_var"], atol=1e-4, rtol=1e-4)
    assert out["z_mu"].shape == (batch, latent_dim)
    assert out["z_var"].shape == (batch, latent_dim)

    print("KERNEL_OK")
</pallas_src>

<mosaic_0001>
module attributes {stable_mosaic.version = 11 : i64} {
  func.func @kernel(%arg0: memref<8x16xf32, #tpu.memory_space<vmem>>, %arg1: memref<32x384xf32, #tpu.memory_space<vmem>>, %arg2: memref<3x384xf32, #tpu.memory_space<vmem>>, %arg3: memref<8x16xf32, #tpu.memory_space<vmem>>) attributes {dimension_semantics = [], scalar_prefetch = 0 : i64, scratch_operands = 0 : i64, tpu.core_type = #tpu.core_type<tc>} {
    %c0 = arith.constant 0 : index
    %c0_0 = arith.constant 0 : index
    %0 = vector.load %arg0[%c0, %c0_0] : memref<8x16xf32, #tpu.memory_space<vmem>>, vector<8x16xf32>
    %c0_1 = arith.constant 0 : index
    %c0_2 = arith.constant 0 : index
    %1 = vector.load %arg1[%c0_1, %c0_2] : memref<32x384xf32, #tpu.memory_space<vmem>>, vector<16x32xf32>
    %cst = arith.constant dense<0.000000e+00> : vector<8x32xf32>
    %2 = tpu.matmul %0, %1, %cst {dimension_numbers = #tpu.dot_dimension_numbers<[1], [0], [0], [1], [0, 0, 1, 1], [], []>} : vector<8x16xf32>, vector<16x32xf32>, vector<8x32xf32> -> vector<8x32xf32>
    %cst_3 = arith.constant dense<0.000000e+00> : vector<32xf32>
    %3 = vector.multi_reduction <add>, %2, %cst_3 [0] : vector<8x32xf32> to vector<32xf32>
    %4 = vector.shape_cast %3 : vector<32xf32> to vector<1x32xf32>
    %cst_4 = arith.constant 8.000000e+00 : f32
    %5 = vector.broadcast %cst_4 : f32 to vector<1x32xf32>
    %6 = arith.divf %4, %5 : vector<1x32xf32>
    %7 = vector.broadcast %6 : vector<1x32xf32> to vector<8x32xf32>
    %8 = arith.subf %2, %7 : vector<8x32xf32>
    %9 = arith.mulf %8, %8 : vector<8x32xf32>
    %cst_5 = arith.constant dense<0.000000e+00> : vector<32xf32>
    %10 = vector.multi_reduction <add>, %9, %cst_5 [0] : vector<8x32xf32> to vector<32xf32>
    %11 = vector.shape_cast %10 : vector<32xf32> to vector<1x32xf32>
    %cst_6 = arith.constant 8.000000e+00 : f32
    %12 = vector.broadcast %cst_6 : f32 to vector<1x32xf32>
    %13 = arith.divf %11, %12 : vector<1x32xf32>
    %c0_7 = arith.constant 0 : index
    %c0_8 = arith.constant 0 : index
    %14 = vector.load %arg2[%c0_7, %c0_8] : memref<3x384xf32, #tpu.memory_space<vmem>>, vector<1x32xf32>
    %c1 = arith.constant 1 : index
    %c0_9 = arith.constant 0 : index
    %15 = vector.load %arg2[%c1, %c0_9] : memref<3x384xf32, #tpu.memory_space<vmem>>, vector<1x32xf32>
    %cst_10 = arith.constant 9.99999974E-6 : f32
    %16 = vector.broadcast %cst_10 : f32 to vector<1x32xf32>
    %17 = arith.addf %13, %16 : vector<1x32xf32>
    %18 = math.rsqrt %17 : vector<1x32xf32>
    %19 = arith.mulf %18, %14 : vector<1x32xf32>
    %20 = vector.broadcast %19 : vector<1x32xf32> to vector<8x32xf32>
    %21 = arith.mulf %8, %20 : vector<8x32xf32>
    %22 = vector.broadcast %15 : vector<1x32xf32> to vector<8x32xf32>
    %23 = arith.addf %21, %22 : vector<8x32xf32>
    %cst_11 = arith.constant 0.000000e+00 : f32
    %24 = vector.broadcast %cst_11 : f32 to vector<8x32xf32>
    %25 = arith.maximumf %23, %24 : vector<8x32xf32>
    %c0_12 = arith.constant 0 : index
    %c128 = arith.constant 128 : index
    %26 = vector.load %arg1[%c0_12, %c128] : memref<32x384xf32, #tpu.memory_space<vmem>>, vector<32x32xf32>
    %cst_13 = arith.constant dense<0.000000e+00> : vector<8x32xf32>
    %27 = tpu.matmul %25, %26, %cst_13 {dimension_numbers = #tpu.dot_dimension_numbers<[1], [0], [0], [1], [0, 0, 1, 1], [], []>} : vector<8x32xf32>, vector<32x32xf32>, vector<8x32xf32> -> vector<8x32xf32>
    %cst_14 = arith.constant dense<0.000000e+00> : vector<32xf32>
    %28 = vector.multi_reduction <add>, %27, %cst_14 [0] : vector<8x32xf32> to vector<32xf32>
    %29 = vector.shape_cast %28 : vector<32xf32> to vector<1x32xf32>
    %cst_15 = arith.constant 8.000000e+00 : f32
    %30 = vector.broadcast %cst_15 : f32 to vector<1x32xf32>
    %31 = arith.divf %29, %30 : vector<1x32xf32>
    %32 = vector.broadcast %31 : vector<1x32xf32> to vector<8x32xf32>
    %33 = arith.subf %27, %32 : vector<8x32xf32>
    %34 = arith.mulf %33, %33 : vector<8x32xf32>
    %cst_16 = arith.constant dense<0.000000e+00> : vector<32xf32>
    %35 = vector.multi_reduction <add>, %34, %cst_16 [0] : vector<8x32xf32> to vector<32xf32>
    %36 = vector.shape_cast %35 : vector<32xf32> to vector<1x32xf32>
    %cst_17 = arith.constant 8.000000e+00 : f32
    %37 = vector.broadcast %cst_17 : f32 to vector<1x32xf32>
    %38 = arith.divf %36, %37 : vector<1x32xf32>
    %c0_18 = arith.constant 0 : index
    %c128_19 = arith.constant 128 : index
    %39 = vector.load %arg2[%c0_18, %c128_19] : memref<3x384xf32, #tpu.memory_space<vmem>>, vector<1x32xf32>
    %c1_20 = arith.constant 1 : index
    %c128_21 = arith.constant 128 : index
    %40 = vector.load %arg2[%c1_20, %c128_21] : memref<3x384xf32, #tpu.memory_space<vmem>>, vector<1x32xf32>
    %cst_22 = arith.constant 9.99999974E-6 : f32
    %41 = vector.broadcast %cst_22 : f32 to vector<1x32xf32>
    %42 = arith.addf %38, %41 : vector<1x32xf32>
    %43 = math.rsqrt %42 : vector<1x32xf32>
    %44 = arith.mulf %43, %39 : vector<1x32xf32>
    %45 = vector.broadcast %44 : vector<1x32xf32> to vector<8x32xf32>
    %46 = arith.mulf %33, %45 : vector<8x32xf32>
    %47 = vector.broadcast %40 : vector<1x32xf32> to vector<8x32xf32>
    %48 = arith.addf %46, %47 : vector<8x32xf32>
    %cst_23 = arith.constant 0.000000e+00 : f32
    %49 = vector.broadcast %cst_23 : f32 to vector<8x32xf32>
    %50 = arith.maximumf %48, %49 : vector<8x32xf32>
    %c0_24 = arith.constant 0 : index
    %c256 = arith.constant 256 : index
    %51 = vector.load %arg1[%c0_24, %c256] : memref<32x384xf32, #tpu.memory_space<vmem>>, vector<32x16xf32>
    %c0_25 = arith.constant 0 : index
    %c256_26 = arith.constant 256 : index
    %52 = vector.load %arg2[%c0_25, %c256_26] : memref<3x384xf32, #tpu.memory_space<vmem>>, vector<1x16xf32>
    %c2 = arith.constant 2 : index
    %c256_27 = arith.constant 256 : index
    %53 = vector.load %arg2[%c2, %c256_27] : memref<3x384xf32, #tpu.memory_space<vmem>>, vector<1x16xf32>
    %cst_28 = arith.constant 5.000000e-01 : f32
    %54 = vector.broadcast %cst_28 : f32 to vector<1x16xf32>
    %55 = arith.cmpf ogt, %53, %54 : vector<1x16xf32>
    %cst_29 = arith.constant dense<0.000000e+00> : vector<8x16xf32>
    %56 = tpu.matmul %50, %51, %cst_29 {dimension_numbers = #tpu.dot_dimension_numbers<[1], [0], [0], [1], [0, 0, 1, 1], [], []>} : vector<8x32xf32>, vector<32x16xf32>, vector<8x16xf32> -> vector<8x16xf32>
    %57 = vector.broadcast %52 : vector<1x16xf32> to vector<8x16xf32>
    %58 = arith.addf %56, %57 : vector<8x16xf32>
    %cst_30 = arith.constant 2.000000e+01 : f32
    %59 = vector.broadcast %cst_30 : f32 to vector<8x16xf32>
    %60 = arith.cmpf ogt, %58, %59 : vector<8x16xf32>
    %cst_31 = arith.constant 2.000000e+01 : f32
    %61 = vector.broadcast %cst_31 : f32 to vector<8x16xf32>
    %62 = arith.minimumf %58, %61 : vector<8x16xf32>
    %63 = math.exp %62 : vector<8x16xf32>
    %64 = math.log1p %63 : vector<8x16xf32>
    %65 = arith.select %60, %58, %64 : vector<8x16xi1>, vector<8x16xf32>
    %66 = vector.shape_cast %55 : vector<1x16xi1> to vector<1x16xi1>
    %67 = vector.broadcast %66 : vector<1x16xi1> to vector<8x16xi1>
    %68 = arith.select %67, %65, %58 : vector<8x16xi1>, vector<8x16xf32>
    %c0_32 = arith.constant 0 : index
    %c0_33 = arith.constant 0 : index
    %69 = vector.load %arg3[%c0_32, %c0_33] : memref<8x16xf32, #tpu.memory_space<vmem>>, vector<8x16xf32>
    tpu.vector_store %arg3[%c0_32, %c0_33], %68 {strides = array<i32>} : memref<8x16xf32, #tpu.memory_space<vmem>>, vector<8x16xf32>,
    return
  }
}

</mosaic_0001>

<llo_original>
// kernel: tpu_custom_call.1
$region0: #{tpu_custom_call.1}
  #allocation0 [shape = 'u32[]', space=smem, size = 0x4, offset = 0x4, fixed_abs, tag = 'smem constant byte address 0x4 - core index']
  #allocation1 [shape = 'u32[72,128]{1,0:T(1,128)}', space=vmem, size = 0x9000, scoped, tag = 'internal scratch']
  %s0 = inlined_call_operand.hbm [shape: f32[8,16], index: 0, kind: input, shape index: {}]
  %s1 = inlined_call_operand.hbm [shape: f32[32,384], index: 1, kind: input, shape index: {}]
  %s2 = inlined_call_operand.hbm [shape: f32[3,384], index: 2, kind: input, shape index: {}]
  %s3 = inlined_call_operand.hbm [shape: f32[8,16], index: 3, kind: output, shape index: {}]
  %s4 = sld [smem:[#allocation0]]
  $region34: #{tpu_custom_call.1} parent=0
    _
  %s6 = ssub.s32 1, %s4
  %s7 = scalar_select 0, %s6, %s4
  $region1: #{tpu_custom_call.1} parent=0
    #allocation2 [shape = 'u8[4096]{0}', space=vmem, size = 0x1000, scoped, tag = 'input window, operand 0, single buffered']
    #allocation3 [shape = 's32[1]{0}', space=sflag, size = 0x4, scoped, tag = 'scoped memory for tpu_custom_call.1']
    #allocation4 [shape = 's32[1]{0}', space=sflag, size = 0x4, scoped, tag = 'scoped memory for tpu_custom_call.1']
    #allocation5 [shape = 'u8[49152]{0}', space=vmem, size = 0xc000, scoped, tag = 'input window, operand 1, single buffered']
    #allocation6 [shape = 's32[1]{0}', space=sflag, size = 0x4, scoped, tag = 'scoped memory for tpu_custom_call.1']
    #allocation7 [shape = 'u8[6144]{0}', space=vmem, size = 0x1800, scoped, tag = 'input window, operand 2, single buffered']
    #allocation8 [shape = 'u8[4096]{0}', space=vmem, size = 0x1000, scoped, tag = 'output window, operand 0, single buffered']
    %8 = vsyncpa [#allocation3], 0
    %9 = vsyncpa [#allocation6], 0
    %10 = vsyncpa [#allocation4], 0
    // Predicated region
    $region2: #{tpu_custom_call.1} parent=1 // pred_check
      _
    $region3: #{tpu_custom_call.1} parent=1 // pred_check_branch
      %12 = sbr.rel (0) target = $region5
    $region4: #{tpu_custom_call.1} parent=1 // pred_region
      %14 = vsyncadd [#allocation3], 0
      %s16 = sshll.u32 %s0, 4
      %s17 = int_to_ptr.hbm [resolvable:$true] %s16
      %s18 = sshll.u32 [#allocation2], 4
      %s19 = int_to_ptr.vmem [resolvable:$true] %s18
      %21 = dma.hbm_to_vmem [thread:$0]  %s17, 128, %s19, [#allocation3]
    $region5: #{tpu_custom_call.1} parent=1 // pred_fallthru
      _
    // Predicated region
    $region6: #{tpu_custom_call.1} parent=1 // pred_check
      _
    $region7: #{tpu_custom_call.1} parent=1 // pred_check_branch
      %23 = sbr.rel (0) target = $region9
    $region8: #{tpu_custom_call.1} parent=1 // pred_region
      %25 = vsyncadd [#allocation6], 0
      %s26 = sshll.u32 %s1, 4
      %s27 = int_to_ptr.hbm [resolvable:$true] %s26
      %s28 = sshll.u32 [#allocation5], 4
      %s29 = int_to_ptr.vmem [resolvable:$true] %s28
      %34 = dma.hbm_to_vmem [thread:$0]  %s27, 1536, %s29, [#allocation6], 384, 384, 24
    $region9: #{tpu_custom_call.1} parent=1 // pred_fallthru
      _
    // Predicated region
    $region10: #{tpu_custom_call.1} parent=1 // pred_check
      _
    $region11: #{tpu_custom_call.1} parent=1 // pred_check_branch
      %36 = sbr.rel (0) target = $region13
    $region12: #{tpu_custom_call.1} parent=1 // pred_region
      %38 = vsyncadd [#allocation6], 0
      %s40 = sshll.u32 %s2, 4
      %s41 = int_to_ptr.hbm [resolvable:$true] %s40
      %s42 = sshll.u32 [#allocation7], 4
      %s43 = int_to_ptr.vmem [resolvable:$true] %s42
      %45 = dma.hbm_to_vmem [thread:$0]  %s41, 192, %s43, [#allocation6]
    $region13: #{tpu_custom_call.1} parent=1 // pred_fallthru
      _
    // Predicated region
    $region14: #{tpu_custom_call.1} parent=1 // pred_check
      _
    $region15: #{tpu_custom_call.1} parent=1 // pred_check_branch
      %47 = sbr.rel (0) target = $region17
    $region16: #{tpu_custom_call.1} parent=1 // pred_region
      %49 = dma.done [#allocation3], 128
    $region17: #{tpu_custom_call.1} parent=1 // pred_fallthru
      _
    // Predicated region
    $region18: #{tpu_custom_call.1} parent=1 // pred_check
      _
    $region19: #{tpu_custom_call.1} parent=1 // pred_check_branch
      %51 = sbr.rel (0) target = $region21
    $region20: #{tpu_custom_call.1} parent=1 // pred_region
      %53 = dma.done [#allocation6], 1536
    $region21: #{tpu_custom_call.1} parent=1 // pred_fallthru
      _
    // Predicated region
    $region22: #{tpu_custom_call.1} parent=1 // pred_check
      _
    $region23: #{tpu_custom_call.1} parent=1 // pred_check_branch
      %55 = sbr.rel (0) target = $region25
    $region24: #{tpu_custom_call.1} parent=1 // pred_region
      %57 = dma.done [#allocation6], 192
    $region25: #{tpu_custom_call.1} parent=1 // pred_fallthru
      _
    %v58 = vld [vmem:[#allocation2] sm:$0xff]
    %v59 = vld [vmem:[#allocation5] sm:$0xff]
    %v60 = vld [vmem:[#allocation5 + $0x18] sm:$0xff]
    %vm61 = vcmask 130048
    %v63 = vsel %vm61, %v58, 0
    %65 = vmatpush.msra.mxu0 0.0
    %66 = vmatpush.msra.mxu0 0.0
    %67 = vmatpush.msra.mxu0 0.0
    %68 = vmatpush.msra.mxu0 0.0
    %69 = vmatpush.msra.mxu0 0.0
    %70 = vmatpush.msra.mxu0 0.0
    %71 = vmatpush.msra.mxu0 0.0
    %72 = vmatpush.msra.mxu0 0.0
    %73 = vmatpush.msra.mxu0 0.0
    %74 = vmatpush.msra.mxu0 0.0
    %75 = vmatpush.msra.mxu0 0.0
    %76 = vmatpush.msra.mxu0 0.0
    %77 = vmatpush.msra.mxu0 0.0
    %78 = vmatpush.msra.mxu0 0.0
    %79 = vmatpush.msra.mxu0 %v60
    %80 = vmatpush.msra.mxu0 %v59
    %81 = vmatmul.f32.gmra.mxu0 %v63
    %v82 = vpop.f32.mrf.mxu0
    %v83 = vadd.f32 0.0, %v82
    %84 = vdwg.mxu0
    %vm85 = vcmask 261120
    %v86 = vsel %vm85, %v83, 0.0
    %v87 = vrot.slane %v86, 4
    %v88 = vadd.f32 %v86, %v87
    %v89 = vrot.slane %v88, 2
    %v90 = vadd.f32 %v88, %v89
    %v91 = vrot.slane %v90, 1
    %v92 = vadd.f32 %v90, %v91
    %v93 = vrcp.pop 8.0
    %v94 = vmul.f32 8.0, %v93
    %v95 = vsub.f32 1.0, %v94
    %v96 = vmul.f32 %v93, %v95
    %v97 = vadd.f32 %v93, %v96
    %vm98 = vweird.f32 %v93
    %v99 = vsel %vm98, %v93, %v97
    %v100 = vmul.f32 %v92, %v99
    %v101 = vsub.f32 %v83, %v100
    %v102 = vmul.f32 %v101, %v101
    %v103 = vsel %vm85, %v102, 0.0
    %v104 = vrot.slane %v103, 4
    %v105 = vadd.f32 %v103, %v104
    %v106 = vrot.slane %v105, 2
    %v107 = vadd.f32 %v105, %v106
    %v108 = vrot.slane %v107, 1
    %v109 = vadd.f32 %v107, %v108
    %v110 = vmul.f32 %v109, %v99
    %v111 = vld [vmem:[#allocation7] sm:$0x1]
    %v112 = vld [vmem:[#allocation7 + $0x1] sm:$0x1]
    %v113 = vadd.f32 %v110, 1e-05
    %v114 = vrsqrt.pop %v113
    %v115 = vmul.f32 %v114, %v113
    %v116 = vmul.f32 %v115, %v114
    %v117 = vmul.f32 0.5, %v116
    %v118 = vsub.f32 1.5, %v117
    %v119 = vmul.f32 %v114, %v118
    %vm120 = vweird.f32 %v113
    %vm121 = vweird.f32 %v114
    %vm122 = vmor %vm120, %vm121
    %v123 = vsel %vm122, %v114, %v119
    %v124 = vmul.f32 %v123, %v111
    %v125 = vperm.slane %v124, 0
    %v126 = vmul.f32 %v101, %v125
    %v127 = vperm.slane %v112, 0
    %v128 = vadd.f32 %v126, %v127
    %v129 = vmax.f32 %v128, 0.0
    %v130 = vld [vmem:[#allocation5 + $0x8] sm:$0xff]
    %v131 = vld [vmem:[#allocation5 + $0x20] sm:$0xff]
    %v132 = vld [vmem:[#allocation5 + $0x38] sm:$0xff]
    %v133 = vld [vmem:[#allocation5 + $0x50] sm:$0xff]
    %v135 = vsel %vm85, %v129, 0
    %137 = vmatpush.msra.mxu0 0.0
    %138 = vmatpush.msra.mxu0 0.0
    %139 = vmatpush.msra.mxu0 0.0
    %140 = vmatpush.msra.mxu0 0.0
    %141 = vmatpush.msra.mxu0 0.0
    %142 = vmatpush.msra.mxu0 0.0
    %143 = vmatpush.msra.mxu0 0.0
    %144 = vmatpush.msra.mxu0 0.0
    %145 = vmatpush.msra.mxu0 0.0
    %146 = vmatpush.msra.mxu0 0.0
    %147 = vmatpush.msra.mxu0 0.0
    %148 = vmatpush.msra.mxu0 0.0
    %149 = vmatpush.msra.mxu0 %v133
    %150 = vmatpush.msra.mxu0 %v132
    %151 = vmatpush.msra.mxu0 %v131
    %152 = vmatpush.msra.mxu0 %v130
    %153 = vmatmul.f32.gmra.mxu0 %v135
    %v154 = vpop.f32.mrf.mxu0
    %v155 = vadd.f32 0.0, %v154
    %156 = vdwg.mxu0
    %v157 = vsel %vm85, %v155, 0.0
    %v158 = vrot.slane %v157, 4
    %v159 = vadd.f32 %v157, %v158
    %v160 = vrot.slane %v159, 2
    %v161 = vadd.f32 %v159, %v160
    %v162 = vrot.slane %v161, 1
    %v163 = vadd.f32 %v161, %v162
    %v164 = vmul.f32 %v163, %v99
    %v165 = vsub.f32 %v155, %v164
    %v166 = vmul.f32 %v165, %v165
    %v167 = vsel %vm85, %v166, 0.0
    %v168 = vrot.slane %v167, 4
    %v169 = vadd.f32 %v167, %v168
    %v170 = vrot.slane %v169, 2
    %v171 = vadd.f32 %v169, %v170
    %v172 = vrot.slane %v171, 1
    %v173 = vadd.f32 %v171, %v172
    %v174 = vmul.f32 %v173, %v99
    %v175 = vld [vmem:[#allocation7 + $0x4] sm:$0x1]
    %v176 = vld [vmem:[#allocation7 + $0x5] sm:$0x1]
    %v177 = vadd.f32 %v174, 1e-05
    %v178 = vrsqrt.pop %v177
    %v179 = vmul.f32 %v178, %v177
    %v180 = vmul.f32 %v179, %v178
    %v181 = vmul.f32 0.5, %v180
    %v182 = vsub.f32 1.5, %v181
    %v183 = vmul.f32 %v178, %v182
    %vm184 = vweird.f32 %v177
    %vm185 = vweird.f32 %v178
    %vm186 = vmor %vm184, %vm185
    %v187 = vsel %vm186, %v178, %v183
    %v188 = vmul.f32 %v187, %v175
    %v189 = vperm.slane %v188, 0
    %v190 = vmul.f32 %v165, %v189
    %v191 = vperm.slane %v176, 0
    %v192 = vadd.f32 %v190, %v191
    %v193 = vmax.f32 %v192, 0.0
    %v194 = vld [vmem:[#allocation5 + $0x10] sm:$0xff]
    %v195 = vld [vmem:[#allocation5 + $0x28] sm:$0xff]
    %v196 = vld [vmem:[#allocation5 + $0x40] sm:$0xff]
    %v197 = vld [vmem:[#allocation5 + $0x58] sm:$0xff]
    %v198 = vld [vmem:[#allocation7 + $0x8] sm:$0x1]
    %v199 = vld [vmem:[#allocation7 + $0xa] sm:$0x1]
    %vm200 = vcmp.gt.f32.partialorder %v199, 0.5
    %v201 = vperm.slane %v198, 0
    %v203 = vsel %vm85, %v193, 0
    %205 = vmatpush.msra.mxu0 0.0
    %206 = vmatpush.msra.mxu0 0.0
    %207 = vmatpush.msra.mxu0 0.0
    %208 = vmatpush.msra.mxu0 0.0
    %209 = vmatpush.msra.mxu0 0.0
    %210 = vmatpush.msra.mxu0 0.0
    %211 = vmatpush.msra.mxu0 0.0
    %212 = vmatpush.msra.mxu0 0.0
    %213 = vmatpush.msra.mxu0 0.0
    %214 = vmatpush.msra.mxu0 0.0
    %215 = vmatpush.msra.mxu0 0.0
    %216 = vmatpush.msra.mxu0 0.0
    %217 = vmatpush.msra.mxu0 %v197
    %218 = vmatpush.msra.mxu0 %v196
    %219 = vmatpush.msra.mxu0 %v195
    %220 = vmatpush.msra.mxu0 %v194
    %221 = vmatmul.f32.gmra.mxu0 %v203
    %v222 = vpop.f32.mrf.mxu0
    %v223 = vadd.f32 %v201, %v222
    %224 = vdwg.mxu0
    %vm225 = vcmp.gt.f32.partialorder %v223, 20.0
    %v226 = vmin.f32 %v223, 20.0
    %v227 = vmul.f32 %v226, 1.442695
    %v228 = vpow.pop %v227
    %v229 = vadd.f32 %v228, 1.0
    %v230 = vlog2.pop %v229
    %v231 = vmul.f32 %v230, 0.6931472
    %v232 = vmul.f32 -0.5, %v228
    %v233 = vadd.f32 %v232, 1.0
    %v234 = vmul.f32 %v233, %v228
    %v235 = vand.u32 2147483647, %v228
    %vm236 = vcmp.lt.f32.partialorder %v235, 0.0004427343
    %v237 = vsel %vm236, %v234, %v231
    %v238 = vsel %vm225, %v223, %v237
    %v239 = vsel %vm200, 1, 0
    %v240 = vperm.slane %v239, 0
    %vm241 = vcmp.eq.s32.totalorder %v240, 1
    %v242 = vsel %vm241, %v238, %v223
    %243 = vst.msk [vmem:[#allocation8] sm:$0xff] %vm61, %v242
    // Predicated region
    $region26: #{tpu_custom_call.1} parent=1 // pred_check
      _
    $region27: #{tpu_custom_call.1} parent=1 // pred_check_branch
      %245 = sbr.rel (0) target = $region29
    $region28: #{tpu_custom_call.1} parent=1 // pred_region
      %247 = vsyncadd [#allocation4], 0
      %s249 = sshll.u32 [#allocation8], 4
      %s250 = int_to_ptr.vmem [resolvable:$true] %s249
      %s251 = sshll.u32 %s3, 4
      %s252 = int_to_ptr.hbm [resolvable:$true] %s251
      %254 = dma.vmem_to_hbm [thread:$0]  %s250, 128, %s252, [#allocation4]
    $region29: #{tpu_custom_call.1} parent=1 // pred_fallthru
      _
    // Predicated region
    $region30: #{tpu_custom_call.1} parent=1 // pred_check
      _
    $region31: #{tpu_custom_call.1} parent=1 // pred_check_branch
      %256 = sbr.rel (0) target = $region33
    $region32: #{tpu_custom_call.1} parent=1 // pred_region
      %258 = dma.done [#allocation4], 128
    $region33: #{tpu_custom_call.1} parent=1 // pred_fallthru
      _
    %259 = vsyncpa [#allocation3], 1
    %260 = vsyncpa [#allocation6], 1
    %261 = vsyncpa [#allocation4], 1

</llo_original>
